<compile_context>
chip_gen: v6e
topology: v6e:2x2x1
jax: 0.10.0
libtpu: 0.0.40
codegen_flags: <defaults>
</compile_context>

<pallas_src>
import jax
import jax.numpy as jnp
from jax.experimental import pallas as pl
from jax.experimental.pallas import tpu as pltpu


def _scale_mul_kernel(x_ref, s_ref, o_ref):
    # x_ref: (TC, HW), s_ref: (TC, 1) -> broadcast multiply along the lane dim.
    o_ref[...] = x_ref[...] * s_ref[...]


def se_scale_mul(x, scale):
    """Computes x * scale with NCHW broadcasting, i.e. (N, C, H, W) * (N, C, 1, 1)."""
    N, C, H, W = x.shape
    assert scale.shape == (N, C, 1, 1)
    NC = N * C
    HW = H * W

    x2 = x.reshape(NC, HW)   # free reshape (no transpose) from NCHW
    s2 = scale.reshape(NC, 1)

    # One block covering all of NC (always legal: block == full array dims), or two
    # sublane-aligned blocks so a v7x megacore can split the work across its 2 TCs.
    num_blocks = 2 if (NC % 16 == 0) else 1
    tc = NC // num_blocks

    out2 = pl.pallas_call(
        _scale_mul_kernel,
        out_shape=jax.ShapeDtypeStruct((NC, HW), x.dtype),
        grid=(num_blocks,),
        in_specs=[
            pl.BlockSpec((tc, HW), lambda i: (i, 0)),
            pl.BlockSpec((tc, 1), lambda i: (i, 0)),
        ],
        out_specs=pl.BlockSpec((tc, HW), lambda i: (i, 0)),
        compiler_params=pltpu.CompilerParams(
            dimension_semantics=("parallel",),
        ),
    )(x2, s2)

    return out2.reshape(N, C, H, W)


if __name__ == "__main__":
    key = jax.random.PRNGKey(0)
    k1, k2 = jax.random.split(key)

    # Shapes from the module: x685 (1, 2304, 7, 7), x690 (1, 2304, 1, 1)
    N, C, H, W = 1, 2304, 7, 7
    x685 = jax.random.normal(k1, (N, C, H, W), dtype=jnp.float32)
    x690 = jax.random.normal(k2, (N, C, 1, 1), dtype=jnp.float32)

    out = se_scale_mul(x685, x690)
    out = jax.block_until_ready(out)

    # Reference check against plain JAX broadcasting (== torch operator.mul semantics).
    ref = x685 * x690
    assert out.shape == (N, C, H, W)
    assert jnp.allclose(out, ref, atol=1e-6, rtol=1e-6)

    print("KERNEL_OK")
</pallas_src>

<mosaic_0001>
module attributes {stable_mosaic.version = 11 : i64} {
  func.func @_scale_mul_kernel(%arg0: i32, %arg1: memref<1152x49xf32, #tpu.memory_space<vmem>>, %arg2: memref<1152x1xf32, #tpu.memory_space<vmem>>, %arg3: memref<1152x49xf32, #tpu.memory_space<vmem>>) attributes {dimension_semantics = [#tpu.dimension_semantics<parallel>], iteration_bounds = array<i64: 2>, scalar_prefetch = 0 : i64, scratch_operands = 0 : i64, tpu.core_type = #tpu.core_type<tc>, window_params = [{transform_indices = @transform_0, window_bounds = array<i64: 1152, 49>}, {transform_indices = @transform_1, window_bounds = array<i64: 1152, 1>}, {transform_indices = @transform_2, window_bounds = array<i64: 1152, 49>}]} {
    %c0 = arith.constant 0 : index
    %c0_0 = arith.constant 0 : index
    %0 = vector.load %arg1[%c0, %c0_0] : memref<1152x49xf32, #tpu.memory_space<vmem>>, vector<1152x49xf32>
    %c0_1 = arith.constant 0 : index
    %c0_2 = arith.constant 0 : index
    %1 = vector.load %arg2[%c0_1, %c0_2] : memref<1152x1xf32, #tpu.memory_space<vmem>>, vector<1152x1xf32>
    %2 = vector.broadcast %1 : vector<1152x1xf32> to vector<1152x49xf32>
    %3 = arith.mulf %0, %2 : vector<1152x49xf32>
    %c0_3 = arith.constant 0 : index
    %c0_4 = arith.constant 0 : index
    %4 = vector.load %arg3[%c0_3, %c0_4] : memref<1152x49xf32, #tpu.memory_space<vmem>>, vector<1152x49xf32>
    tpu.vector_store %arg3[%c0_3, %c0_4], %3 {strides = array<i32>} : memref<1152x49xf32, #tpu.memory_space<vmem>>, vector<1152x49xf32>,
    return
  }
  func.func @transform_0(%arg0: i32) -> (i32, i32) {
    %c0_i32 = arith.constant 0 : i32
    %c0_i32_0 = arith.constant 0 : i32
    return %arg0, %c0_i32 : i32, i32
  }
  func.func @transform_1(%arg0: i32) -> (i32, i32) {
    %c0_i32 = arith.constant 0 : i32
    %c0_i32_0 = arith.constant 0 : i32
    return %arg0, %c0_i32 : i32, i32
  }
  func.func @transform_2(%arg0: i32) -> (i32, i32) {
    %c0_i32 = arith.constant 0 : i32
    %c0_i32_0 = arith.constant 0 : i32
    return %arg0, %c0_i32 : i32, i32
  }
}

</mosaic_0001>

<llo_original>
// kernel: tpu_custom_call.1
$region0: #{tpu_custom_call.1}
  #allocation0 [shape = 'u32[]', space=smem, size = 0x4, offset = 0x4, fixed_abs, tag = 'smem constant byte address 0x4 - core index']
  #allocation1 [shape = 'u32[144,128]{1,0:T(1,128)}', space=vmem, size = 0x12000, scoped, tag = 'internal scratch']
  %s0 = inlined_call_operand.vmem [shape: f32[2304,49], index: 0, kind: input, shape index: {}]
  %s1 = inlined_call_operand.vmem [shape: f32[2304,1], index: 1, kind: input, shape index: {}]
  %s2 = inlined_call_operand.vmem [shape: f32[2304,49], index: 2, kind: output, shape index: {}]
  %s3 = sld [smem:[#allocation0]]
  $region41: #{tpu_custom_call.1} parent=0
    _
  %s5 = ssub.s32 1, %s3
  %s6 = scalar_select 0, %s5, %s3
  loop: start=0, step=1, limit=4
  $region2: #{tpu_custom_call.1} parent=0 // loop_pre_header
    _
  $region3: #{tpu_custom_call.1} parent=0 // loop_header
    %s8 = sphi 0, %s12
    %p9 = scmp.ge.s32.totalorder %s8, 4
    %s18 = sphi 0, %s20
    %s21 = sphi 0, %s18
    %s22 = sphi 0, %s21
    %s38 = sphi 0, %s22
    %s44 = sphi 0, %s46
    %s47 = sphi 0, %s44
    %s48 = sphi 0, %s47
    %s64 = sphi 0, %s48
    %s70 = sphi 0, %s72
    %s73 = sphi 0, %s70
    %s74 = sphi 0, %s73
    %s90 = sphi 0, %s74
  $region4: #{tpu_custom_call.1} parent=0 // loop_header_branch
    %11 = sbr.rel (%p9) target = $region8
  $region5: #{tpu_custom_call.1} parent=0 // loop_body
    %s13 = ssub.s32 %s8, 1
    %s14 = ssub.s32 %s8, 2
    %s15 = sadd.s32 %s8, 1
    %s16 = ssub.s32 %s8, %s15
    %p17 = scmp.eq.s32.totalorder %s16, 0
    %s19 = sadd.s32 %s18, 1
    %s20 = scalar_select %p17, %s18, %s19
    %p23 = pneg %p17
    %p24 = scmp.eq.s32.totalorder %s8, 1
    %p25 = por %p23, %p24
    %p26 = scmp.ne.s32.totalorder %s18, %s21
    %p27 = scmp.eq.s32.totalorder %s8, 0
    %p28 = por %p26, %p27
    %p29 = scmp.ne.s32.totalorder %s18, %s21
    %p30 = scmp.eq.s32.totalorder %s13, 1
    %p31 = por %p29, %p30
    %p32 = scmp.ne.s32.totalorder %s21, %s22
    %p33 = scmp.eq.s32.totalorder %s13, 0
    %p34 = por %p32, %p33
    %p35 = scmp.ne.s32.totalorder %s21, %s22
    %p36 = scmp.eq.s32.totalorder %s14, 1
    %p37 = por %p35, %p36
    %p39 = scmp.ne.s32.totalorder %s22, %s38
    %p40 = scmp.eq.s32.totalorder %s14, 0
    %p41 = por %p39, %p40
    %s42 = ssub.s32 %s8, %s15
    %p43 = scmp.eq.s32.totalorder %s42, 0
    %s45 = sadd.s32 %s44, 1
    %s46 = scalar_select %p43, %s44, %s45
    %p49 = pneg %p43
    %p50 = scmp.eq.s32.totalorder %s8, 1
    %p51 = por %p49, %p50
    %p52 = scmp.ne.s32.totalorder %s44, %s47
    %p53 = scmp.eq.s32.totalorder %s8, 0
    %p54 = por %p52, %p53
    %p55 = scmp.ne.s32.totalorder %s44, %s47
    %p56 = scmp.eq.s32.totalorder %s13, 1
    %p57 = por %p55, %p56
    %p58 = scmp.ne.s32.totalorder %s47, %s48
    %p59 = scmp.eq.s32.totalorder %s13, 0
    %p60 = por %p58, %p59
    %p61 = scmp.ne.s32.totalorder %s47, %s48
    %p62 = scmp.eq.s32.totalorder %s14, 1
    %p63 = por %p61, %p62
    %p65 = scmp.ne.s32.totalorder %s48, %s64
    %p66 = scmp.eq.s32.totalorder %s14, 0
    %p67 = por %p65, %p66
    %s68 = ssub.s32 %s8, %s15
    %p69 = scmp.eq.s32.totalorder %s68, 0
    %s71 = sadd.s32 %s70, 1
    %s72 = scalar_select %p69, %s70, %s71
    %p75 = pneg %p69
    %p76 = scmp.eq.s32.totalorder %s8, 1
    %p77 = por %p75, %p76
    %p78 = scmp.ne.s32.totalorder %s70, %s73
    %p79 = scmp.eq.s32.totalorder %s8, 0
    %p80 = por %p78, %p79
    %p81 = scmp.ne.s32.totalorder %s70, %s73
    %p82 = scmp.eq.s32.totalorder %s13, 1
    %p83 = por %p81, %p82
    %p84 = scmp.ne.s32.totalorder %s73, %s74
    %p85 = scmp.eq.s32.totalorder %s13, 0
    %p86 = por %p84, %p85
    %p87 = scmp.ne.s32.totalorder %s73, %s74
    %p88 = scmp.eq.s32.totalorder %s14, 1
    %p89 = por %p87, %p88
    %p91 = scmp.ne.s32.totalorder %s74, %s90
    %p92 = scmp.eq.s32.totalorder %s14, 0
    %p93 = por %p91, %p92
    %p94 = scmp.le.s32.totalorder 1, %s8
    %p95 = scmp.lt.s32.totalorder %s8, 3
    %p96 = pnand %p94, %p95
    %p97 = pneg %p96
    // Predicated region
    $region9: #{tpu_custom_call.1} parent=5 // pred_check
      _
    $region10: #{tpu_custom_call.1} parent=5 // pred_check_branch
      %99 = sbr.rel (%p96) target = $region12
    $region11: #{tpu_custom_call.1} parent=5 // pred_region
      %s100 = ssub.s32 %s8, 1
    $region12: #{tpu_custom_call.1} parent=5 // pred_fallthru
      _
    %p101 = scmp.lt.s32.totalorder %s8, 2
    // Predicated region
    $region13: #{tpu_custom_call.1} parent=5 // pred_check
      %p102 = pneg %p101
    $region14: #{tpu_custom_call.1} parent=5 // pred_check_branch
      %104 = sbr.rel (%p102) target = $region16
    $region15: #{tpu_custom_call.1} parent=5 // pred_region
      // Predicated region
      $region17: #{tpu_custom_call.1} parent=15 // pred_check
        %p105 = pneg %p28
      $region18: #{tpu_custom_call.1} parent=15 // pred_check_branch
        %107 = sbr.rel (%p105) target = $region20
      $region19: #{tpu_custom_call.1} parent=15 // pred_region
        %s108 = smul.u32 144, %s8
        %p109 = scmp.lt.s32.totalorder %s108, 287
        %s110 = scalar_select %p109, %s108, 287
        %s111 = smul.addr %s110, 8
        %s112 = scalar_lea.vmem %s0, %s111
        %s113 = smul.u32 144, %s8
      $region20: #{tpu_custom_call.1} parent=15 // pred_fallthru
        _
      // Predicated region
      $region21: #{tpu_custom_call.1} parent=15 // pred_check
        %p114 = pneg %p54
      $region22: #{tpu_custom_call.1} parent=15 // pred_check_branch
        %116 = sbr.rel (%p114) target = $region24
      $region23: #{tpu_custom_call.1} parent=15 // pred_region
        %s117 = smul.u32 144, %s8
        %p118 = scmp.lt.s32.totalorder %s117, 287
        %s119 = scalar_select %p118, %s117, 287
        %s120 = smul.addr %s119, 8
        %s121 = scalar_lea.vmem %s1, %s120
        %s122 = smul.u32 144, %s8
      $region24: #{tpu_custom_call.1} parent=15 // pred_fallthru
        _
    $region16: #{tpu_custom_call.1} parent=5 // pred_fallthru
      _
    %p123 = scmp.le.s32.totalorder 1, %s8
    %p124 = scmp.lt.s32.totalorder %s8, 3
    %p125 = pnand %p123, %p124
    %p126 = pneg %p125
    // Predicated region
    $region25: #{tpu_custom_call.1} parent=5 // pred_check
      _
    $region26: #{tpu_custom_call.1} parent=5 // pred_check_branch
      %128 = sbr.rel (%p125) target = $region28
    $region27: #{tpu_custom_call.1} parent=5 // pred_region
      %s129 = ssub.s32 %s8, 1
      %s130 = smul.u32 144, %s13
      %p131 = scmp.lt.s32.totalorder %s130, 287
      %s132 = scalar_select %p131, %s130, 287
      %s133 = smul.addr %s132, 8
      %s134 = scalar_lea.vmem %s0, %s133
      %p135 = pneg %p34
      %p136 = pneg %p31
      %s137 = smul.u32 144, %s13
      %p138 = scmp.lt.s32.totalorder %s137, 287
      %s139 = scalar_select %p138, %s137, 287
      %s140 = smul.addr %s139, 8
      %s141 = scalar_lea.vmem %s1, %s140
      %p142 = pneg %p60
      %p143 = pneg %p57
      %p144 = pneg %p86
      %p145 = pneg %p83
      %s146 = smul.u32 144, %s13
      %p147 = scmp.lt.s32.totalorder %s146, 287
      %s148 = scalar_select %p147, %s146, 287
      %s149 = smul.addr %s148, 8
      %s150 = scalar_lea.vmem %s2, %s149
      %s151 = smul.u32 144, %s13
      %p152 = scmp.lt.s32.totalorder %s151, 287
      %s153 = scalar_select %p152, %s151, 287
      %s154 = smul.addr %s153, 8
      %s155 = scalar_lea.vmem %s0, %s154
      %s156 = smul.u32 144, %s13
      %s157 = smul.u32 144, %s13
      %p158 = scmp.lt.s32.totalorder %s157, 287
      %s159 = scalar_select %p158, %s157, 287
      %s160 = smul.addr %s159, 8
      %s161 = scalar_lea.vmem %s1, %s160
      %s162 = smul.u32 144, %s13
      %s163 = smul.u32 144, %s13
      %p164 = scmp.lt.s32.totalorder %s163, 287
      %s165 = scalar_select %p164, %s163, 287
      %s166 = smul.addr %s165, 8
      %s167 = scalar_lea.vmem %s2, %s166
      %s168 = smul.u32 144, %s13
      %v169 = vld [vmem:[%s155] sm:$0xff]
      %v170 = vld [vmem:[%s155 + $0x8] sm:$0xff]
      %v171 = vld [vmem:[%s155 + $0x10] sm:$0xff]
      %v172 = vld [vmem:[%s155 + $0x18] sm:$0xff]
      %v173 = vld [vmem:[%s155 + $0x20] sm:$0xff]
      %v174 = vld [vmem:[%s155 + $0x28] sm:$0xff]
      %v175 = vld [vmem:[%s155 + $0x30] sm:$0xff]
      %v176 = vld [vmem:[%s155 + $0x38] sm:$0xff]
      %v177 = vld [vmem:[%s155 + $0x40] sm:$0xff]
      %v178 = vld [vmem:[%s155 + $0x48] sm:$0xff]
      %v179 = vld [vmem:[%s155 + $0x50] sm:$0xff]
      %v180 = vld [vmem:[%s155 + $0x58] sm:$0xff]
      %v181 = vld [vmem:[%s155 + $0x60] sm:$0xff]
      %v182 = vld [vmem:[%s155 + $0x68] sm:$0xff]
      %v183 = vld [vmem:[%s155 + $0x70] sm:$0xff]
      %v184 = vld [vmem:[%s155 + $0x78] sm:$0xff]
      %v185 = vld [vmem:[%s155 + $0x80] sm:$0xff]
      %v186 = vld [vmem:[%s155 + $0x88] sm:$0xff]
      %v187 = vld [vmem:[%s155 + $0x90] sm:$0xff]
      %v188 = vld [vmem:[%s155 + $0x98] sm:$0xff]
      %v189 = vld [vmem:[%s155 + $0xa0] sm:$0xff]
      %v190 = vld [vmem:[%s155 + $0xa8] sm:$0xff]
      %v191 = vld [vmem:[%s155 + $0xb0] sm:$0xff]
      %v192 = vld [vmem:[%s155 + $0xb8] sm:$0xff]
      %v193 = vld [vmem:[%s155 + $0xc0] sm:$0xff]
      %v194 = vld [vmem:[%s155 + $0xc8] sm:$0xff]
      %v195 = vld [vmem:[%s155 + $0xd0] sm:$0xff]
      %v196 = vld [vmem:[%s155 + $0xd8] sm:$0xff]
      %v197 = vld [vmem:[%s155 + $0xe0] sm:$0xff]
      %v198 = vld [vmem:[%s155 + $0xe8] sm:$0xff]
      %v199 = vld [vmem:[%s155 + $0xf0] sm:$0xff]
      %v200 = vld [vmem:[%s155 + $0xf8] sm:$0xff]
      %v201 = vld [vmem:[%s155 + $0x100] sm:$0xff]
      %v202 = vld [vmem:[%s155 + $0x108] sm:$0xff]
      %v203 = vld [vmem:[%s155 + $0x110] sm:$0xff]
      %v204 = vld [vmem:[%s155 + $0x118] sm:$0xff]
      %v205 = vld [vmem:[%s155 + $0x120] sm:$0xff]
      %v206 = vld [vmem:[%s155 + $0x128] sm:$0xff]
      %v207 = vld [vmem:[%s155 + $0x130] sm:$0xff]
      %v208 = vld [vmem:[%s155 + $0x138] sm:$0xff]
      %v209 = vld [vmem:[%s155 + $0x140] sm:$0xff]
      %v210 = vld [vmem:[%s155 + $0x148] sm:$0xff]
      %v211 = vld [vmem:[%s155 + $0x150] sm:$0xff]
      %v212 = vld [vmem:[%s155 + $0x158] sm:$0xff]
      %v213 = vld [vmem:[%s155 + $0x160] sm:$0xff]
      %v214 = vld [vmem:[%s155 + $0x168] sm:$0xff]
      %v215 = vld [vmem:[%s155 + $0x170] sm:$0xff]
      %v216 = vld [vmem:[%s155 + $0x178] sm:$0xff]
      %v217 = vld [vmem:[%s155 + $0x180] sm:$0xff]
      %v218 = vld [vmem:[%s155 + $0x188] sm:$0xff]
      %v219 = vld [vmem:[%s155 + $0x190] sm:$0xff]
      %v220 = vld [vmem:[%s155 + $0x198] sm:$0xff]
      %v221 = vld [vmem:[%s155 + $0x1a0] sm:$0xff]
      %v222 = vld [vmem:[%s155 + $0x1a8] sm:$0xff]
      %v223 = vld [vmem:[%s155 + $0x1b0] sm:$0xff]
      %v224 = vld [vmem:[%s155 + $0x1b8] sm:$0xff]
      %v225 = vld [vmem:[%s155 + $0x1c0] sm:$0xff]
      %v226 = vld [vmem:[%s155 + $0x1c8] sm:$0xff]
      %v227 = vld [vmem:[%s155 + $0x1d0] sm:$0xff]
      %v228 = vld [vmem:[%s155 + $0x1d8] sm:$0xff]
      %v229 = vld [vmem:[%s155 + $0x1e0] sm:$0xff]
      %v230 = vld [vmem:[%s155 + $0x1e8] sm:$0xff]
      %v231 = vld [vmem:[%s155 + $0x1f0] sm:$0xff]
      %v232 = vld [vmem:[%s155 + $0x1f8] sm:$0xff]
      %v233 = vld [vmem:[%s155 + $0x200] sm:$0xff]
      %v234 = vld [vmem:[%s155 + $0x208] sm:$0xff]
      %v235 = vld [vmem:[%s155 + $0x210] sm:$0xff]
      %v236 = vld [vmem:[%s155 + $0x218] sm:$0xff]
      %v237 = vld [vmem:[%s155 + $0x220] sm:$0xff]
      %v238 = vld [vmem:[%s155 + $0x228] sm:$0xff]
      %v239 = vld [vmem:[%s155 + $0x230] sm:$0xff]
      %v240 = vld [vmem:[%s155 + $0x238] sm:$0xff]
      %v241 = vld [vmem:[%s155 + $0x240] sm:$0xff]
      %v242 = vld [vmem:[%s155 + $0x248] sm:$0xff]
      %v243 = vld [vmem:[%s155 + $0x250] sm:$0xff]
      %v244 = vld [vmem:[%s155 + $0x258] sm:$0xff]
      %v245 = vld [vmem:[%s155 + $0x260] sm:$0xff]
      %v246 = vld [vmem:[%s155 + $0x268] sm:$0xff]
      %v247 = vld [vmem:[%s155 + $0x270] sm:$0xff]
      %v248 = vld [vmem:[%s155 + $0x278] sm:$0xff]
      %v249 = vld [vmem:[%s155 + $0x280] sm:$0xff]
      %v250 = vld [vmem:[%s155 + $0x288] sm:$0xff]
      %v251 = vld [vmem:[%s155 + $0x290] sm:$0xff]
      %v252 = vld [vmem:[%s155 + $0x298] sm:$0xff]
      %v253 = vld [vmem:[%s155 + $0x2a0] sm:$0xff]
      %v254 = vld [vmem:[%s155 + $0x2a8] sm:$0xff]
      %v255 = vld [vmem:[%s155 + $0x2b0] sm:$0xff]
      %v256 = vld [vmem:[%s155 + $0x2b8] sm:$0xff]
      %v257 = vld [vmem:[%s155 + $0x2c0] sm:$0xff]
      %v258 = vld [vmem:[%s155 + $0x2c8] sm:$0xff]
      %v259 = vld [vmem:[%s155 + $0x2d0] sm:$0xff]
      %v260 = vld [vmem:[%s155 + $0x2d8] sm:$0xff]
      %v261 = vld [vmem:[%s155 + $0x2e0] sm:$0xff]
      %v262 = vld [vmem:[%s155 + $0x2e8] sm:$0xff]
      %v263 = vld [vmem:[%s155 + $0x2f0] sm:$0xff]
      %v264 = vld [vmem:[%s155 + $0x2f8] sm:$0xff]
      %v265 = vld [vmem:[%s155 + $0x300] sm:$0xff]
      %v266 = vld [vmem:[%s155 + $0x308] sm:$0xff]
      %v267 = vld [vmem:[%s155 + $0x310] sm:$0xff]
      %v268 = vld [vmem:[%s155 + $0x318] sm:$0xff]
      %v269 = vld [vmem:[%s155 + $0x320] sm:$0xff]
      %v270 = vld [vmem:[%s155 + $0x328] sm:$0xff]
      %v271 = vld [vmem:[%s155 + $0x330] sm:$0xff]
      %v272 = vld [vmem:[%s155 + $0x338] sm:$0xff]
      %v273 = vld [vmem:[%s155 + $0x340] sm:$0xff]
      %v274 = vld [vmem:[%s155 + $0x348] sm:$0xff]
      %v275 = vld [vmem:[%s155 + $0x350] sm:$0xff]
      %v276 = vld [vmem:[%s155 + $0x358] sm:$0xff]
      %v277 = vld [vmem:[%s155 + $0x360] sm:$0xff]
      %v278 = vld [vmem:[%s155 + $0x368] sm:$0xff]
      %v279 = vld [vmem:[%s155 + $0x370] sm:$0xff]
      %v280 = vld [vmem:[%s155 + $0x378] sm:$0xff]
      %v281 = vld [vmem:[%s155 + $0x380] sm:$0xff]
      %v282 = vld [vmem:[%s155 + $0x388] sm:$0xff]
      %v283 = vld [vmem:[%s155 + $0x390] sm:$0xff]
      %v284 = vld [vmem:[%s155 + $0x398] sm:$0xff]
      %v285 = vld [vmem:[%s155 + $0x3a0] sm:$0xff]
      %v286 = vld [vmem:[%s155 + $0x3a8] sm:$0xff]
      %v287 = vld [vmem:[%s155 + $0x3b0] sm:$0xff]
      %v288 = vld [vmem:[%s155 + $0x3b8] sm:$0xff]
      %v289 = vld [vmem:[%s155 + $0x3c0] sm:$0xff]
      %v290 = vld [vmem:[%s155 + $0x3c8] sm:$0xff]
      %v291 = vld [vmem:[%s155 + $0x3d0] sm:$0xff]
      %v292 = vld [vmem:[%s155 + $0x3d8] sm:$0xff]
      %v293 = vld [vmem:[%s155 + $0x3e0] sm:$0xff]
      %v294 = vld [vmem:[%s155 + $0x3e8] sm:$0xff]
      %v295 = vld [vmem:[%s155 + $0x3f0] sm:$0xff]
      %v296 = vld [vmem:[%s155 + $0x3f8] sm:$0xff]
      %v297 = vld [vmem:[%s155 + $0x400] sm:$0xff]
      %v298 = vld [vmem:[%s155 + $0x408] sm:$0xff]
      %v299 = vld [vmem:[%s155 + $0x410] sm:$0xff]
      %v300 = vld [vmem:[%s155 + $0x418] sm:$0xff]
      %v301 = vld [vmem:[%s155 + $0x420] sm:$0xff]
      %v302 = vld [vmem:[%s155 + $0x428] sm:$0xff]
      %v303 = vld [vmem:[%s155 + $0x430] sm:$0xff]
      %v304 = vld [vmem:[%s155 + $0x438] sm:$0xff]
      %v305 = vld [vmem:[%s155 + $0x440] sm:$0xff]
      %v306 = vld [vmem:[%s155 + $0x448] sm:$0xff]
      %v307 = vld [vmem:[%s155 + $0x450] sm:$0xff]
      %v308 = vld [vmem:[%s155 + $0x458] sm:$0xff]
      %v309 = vld [vmem:[%s155 + $0x460] sm:$0xff]
      %v310 = vld [vmem:[%s155 + $0x468] sm:$0xff]
      %v311 = vld [vmem:[%s155 + $0x470] sm:$0xff]
      %v312 = vld [vmem:[%s155 + $0x478] sm:$0xff]
      %v313 = vld [vmem:[%s161] sm:$0xff]
      %v314 = vld [vmem:[%s161 + $0x8] sm:$0xff]
      %v315 = vld [vmem:[%s161 + $0x10] sm:$0xff]
      %v316 = vld [vmem:[%s161 + $0x18] sm:$0xff]
      %v317 = vld [vmem:[%s161 + $0x20] sm:$0xff]
      %v318 = vld [vmem:[%s161 + $0x28] sm:$0xff]
      %v319 = vld [vmem:[%s161 + $0x30] sm:$0xff]
      %v320 = vld [vmem:[%s161 + $0x38] sm:$0xff]
      %v321 = vld [vmem:[%s161 + $0x40] sm:$0xff]
      %v322 = vld [vmem:[%s161 + $0x48] sm:$0xff]
      %v323 = vld [vmem:[%s161 + $0x50] sm:$0xff]
      %v324 = vld [vmem:[%s161 + $0x58] sm:$0xff]
      %v325 = vld [vmem:[%s161 + $0x60] sm:$0xff]
      %v326 = vld [vmem:[%s161 + $0x68] sm:$0xff]
      %v327 = vld [vmem:[%s161 + $0x70] sm:$0xff]
      %v328 = vld [vmem:[%s161 + $0x78] sm:$0xff]
      %v329 = vld [vmem:[%s161 + $0x80] sm:$0xff]
      %v330 = vld [vmem:[%s161 + $0x88] sm:$0xff]
      %v331 = vld [vmem:[%s161 + $0x90] sm:$0xff]
      %v332 = vld [vmem:[%s161 + $0x98] sm:$0xff]
      %v333 = vld [vmem:[%s161 + $0xa0] sm:$0xff]
      %v334 = vld [vmem:[%s161 + $0xa8] sm:$0xff]
      %v335 = vld [vmem:[%s161 + $0xb0] sm:$0xff]
      %v336 = vld [vmem:[%s161 + $0xb8] sm:$0xff]
      %v337 = vld [vmem:[%s161 + $0xc0] sm:$0xff]
      %v338 = vld [vmem:[%s161 + $0xc8] sm:$0xff]
      %v339 = vld [vmem:[%s161 + $0xd0] sm:$0xff]
      %v340 = vld [vmem:[%s161 + $0xd8] sm:$0xff]
      %v341 = vld [vmem:[%s161 + $0xe0] sm:$0xff]
      %v342 = vld [vmem:[%s161 + $0xe8] sm:$0xff]
      %v343 = vld [vmem:[%s161 + $0xf0] sm:$0xff]
      %v344 = vld [vmem:[%s161 + $0xf8] sm:$0xff]
      %v345 = vld [vmem:[%s161 + $0x100] sm:$0xff]
      %v346 = vld [vmem:[%s161 + $0x108] sm:$0xff]
      %v347 = vld [vmem:[%s161 + $0x110] sm:$0xff]
      %v348 = vld [vmem:[%s161 + $0x118] sm:$0xff]
      %v349 = vld [vmem:[%s161 + $0x120] sm:$0xff]
      %v350 = vld [vmem:[%s161 + $0x128] sm:$0xff]
      %v351 = vld [vmem:[%s161 + $0x130] sm:$0xff]
      %v352 = vld [vmem:[%s161 + $0x138] sm:$0xff]
      %v353 = vld [vmem:[%s161 + $0x140] sm:$0xff]
      %v354 = vld [vmem:[%s161 + $0x148] sm:$0xff]
      %v355 = vld [vmem:[%s161 + $0x150] sm:$0xff]
      %v356 = vld [vmem:[%s161 + $0x158] sm:$0xff]
      %v357 = vld [vmem:[%s161 + $0x160] sm:$0xff]
      %v358 = vld [vmem:[%s161 + $0x168] sm:$0xff]
      %v359 = vld [vmem:[%s161 + $0x170] sm:$0xff]
      %v360 = vld [vmem:[%s161 + $0x178] sm:$0xff]
      %v361 = vld [vmem:[%s161 + $0x180] sm:$0xff]
      %v362 = vld [vmem:[%s161 + $0x188] sm:$0xff]
      %v363 = vld [vmem:[%s161 + $0x190] sm:$0xff]
      %v364 = vld [vmem:[%s161 + $0x198] sm:$0xff]
      %v365 = vld [vmem:[%s161 + $0x1a0] sm:$0xff]
      %v366 = vld [vmem:[%s161 + $0x1a8] sm:$0xff]
      %v367 = vld [vmem:[%s161 + $0x1b0] sm:$0xff]
      %v368 = vld [vmem:[%s161 + $0x1b8] sm:$0xff]
      %v369 = vld [vmem:[%s161 + $0x1c0] sm:$0xff]
      %v370 = vld [vmem:[%s161 + $0x1c8] sm:$0xff]
      %v371 = vld [vmem:[%s161 + $0x1d0] sm:$0xff]
      %v372 = vld [vmem:[%s161 + $0x1d8] sm:$0xff]
      %v373 = vld [vmem:[%s161 + $0x1e0] sm:$0xff]
      %v374 = vld [vmem:[%s161 + $0x1e8] sm:$0xff]
      %v375 = vld [vmem:[%s161 + $0x1f0] sm:$0xff]
      %v376 = vld [vmem:[%s161 + $0x1f8] sm:$0xff]
      %v377 = vld [vmem:[%s161 + $0x200] sm:$0xff]
      %v378 = vld [vmem:[%s161 + $0x208] sm:$0xff]
      %v379 = vld [vmem:[%s161 + $0x210] sm:$0xff]
      %v380 = vld [vmem:[%s161 + $0x218] sm:$0xff]
      %v381 = vld [vmem:[%s161 + $0x220] sm:$0xff]
      %v382 = vld [vmem:[%s161 + $0x228] sm:$0xff]
      %v383 = vld [vmem:[%s161 + $0x230] sm:$0xff]
      %v384 = vld [vmem:[%s161 + $0x238] sm:$0xff]
      %v385 = vld [vmem:[%s161 + $0x240] sm:$0xff]
      %v386 = vld [vmem:[%s161 + $0x248] sm:$0xff]
      %v387 = vld [vmem:[%s161 + $0x250] sm:$0xff]
      %v388 = vld [vmem:[%s161 + $0x258] sm:$0xff]
      %v389 = vld [vmem:[%s161 + $0x260] sm:$0xff]
      %v390 = vld [vmem:[%s161 + $0x268] sm:$0xff]
      %v391 = vld [vmem:[%s161 + $0x270] sm:$0xff]
      %v392 = vld [vmem:[%s161 + $0x278] sm:$0xff]
      %v393 = vld [vmem:[%s161 + $0x280] sm:$0xff]
      %v394 = vld [vmem:[%s161 + $0x288] sm:$0xff]
      %v395 = vld [vmem:[%s161 + $0x290] sm:$0xff]
      %v396 = vld [vmem:[%s161 + $0x298] sm:$0xff]
      %v397 = vld [vmem:[%s161 + $0x2a0] sm:$0xff]
      %v398 = vld [vmem:[%s161 + $0x2a8] sm:$0xff]
      %v399 = vld [vmem:[%s161 + $0x2b0] sm:$0xff]
      %v400 = vld [vmem:[%s161 + $0x2b8] sm:$0xff]
      %v401 = vld [vmem:[%s161 + $0x2c0] sm:$0xff]
      %v402 = vld [vmem:[%s161 + $0x2c8] sm:$0xff]
      %v403 = vld [vmem:[%s161 + $0x2d0] sm:$0xff]
      %v404 = vld [vmem:[%s161 + $0x2d8] sm:$0xff]
      %v405 = vld [vmem:[%s161 + $0x2e0] sm:$0xff]
      %v406 = vld [vmem:[%s161 + $0x2e8] sm:$0xff]
      %v407 = vld [vmem:[%s161 + $0x2f0] sm:$0xff]
      %v408 = vld [vmem:[%s161 + $0x2f8] sm:$0xff]
      %v409 = vld [vmem:[%s161 + $0x300] sm:$0xff]
      %v410 = vld [vmem:[%s161 + $0x308] sm:$0xff]
      %v411 = vld [vmem:[%s161 + $0x310] sm:$0xff]
      %v412 = vld [vmem:[%s161 + $0x318] sm:$0xff]
      %v413 = vld [vmem:[%s161 + $0x320] sm:$0xff]
      %v414 = vld [vmem:[%s161 + $0x328] sm:$0xff]
      %v415 = vld [vmem:[%s161 + $0x330] sm:$0xff]
      %v416 = vld [vmem:[%s161 + $0x338] sm:$0xff]
      %v417 = vld [vmem:[%s161 + $0x340] sm:$0xff]
      %v418 = vld [vmem:[%s161 + $0x348] sm:$0xff]
      %v419 = vld [vmem:[%s161 + $0x350] sm:$0xff]
      %v420 = vld [vmem:[%s161 + $0x358] sm:$0xff]
      %v421 = vld [vmem:[%s161 + $0x360] sm:$0xff]
      %v422 = vld [vmem:[%s161 + $0x368] sm:$0xff]
      %v423 = vld [vmem:[%s161 + $0x370] sm:$0xff]
      %v424 = vld [vmem:[%s161 + $0x378] sm:$0xff]
      %v425 = vld [vmem:[%s161 + $0x380] sm:$0xff]
      %v426 = vld [vmem:[%s161 + $0x388] sm:$0xff]
      %v427 = vld [vmem:[%s161 + $0x390] sm:$0xff]
      %v428 = vld [vmem:[%s161 + $0x398] sm:$0xff]
      %v429 = vld [vmem:[%s161 + $0x3a0] sm:$0xff]
      %v430 = vld [vmem:[%s161 + $0x3a8] sm:$0xff]
      %v431 = vld [vmem:[%s161 + $0x3b0] sm:$0xff]
      %v432 = vld [vmem:[%s161 + $0x3b8] sm:$0xff]
      %v433 = vld [vmem:[%s161 + $0x3c0] sm:$0xff]
      %v434 = vld [vmem:[%s161 + $0x3c8] sm:$0xff]
      %v435 = vld [vmem:[%s161 + $0x3d0] sm:$0xff]
      %v436 = vld [vmem:[%s161 + $0x3d8] sm:$0xff]
      %v437 = vld [vmem:[%s161 + $0x3e0] sm:$0xff]
      %v438 = vld [vmem:[%s161 + $0x3e8] sm:$0xff]
      %v439 = vld [vmem:[%s161 + $0x3f0] sm:$0xff]
      %v440 = vld [vmem:[%s161 + $0x3f8] sm:$0xff]
      %v441 = vld [vmem:[%s161 + $0x400] sm:$0xff]
      %v442 = vld [vmem:[%s161 + $0x408] sm:$0xff]
      %v443 = vld [vmem:[%s161 + $0x410] sm:$0xff]
      %v444 = vld [vmem:[%s161 + $0x418] sm:$0xff]
      %v445 = vld [vmem:[%s161 + $0x420] sm:$0xff]
      %v446 = vld [vmem:[%s161 + $0x428] sm:$0xff]
      %v447 = vld [vmem:[%s161 + $0x430] sm:$0xff]
      %v448 = vld [vmem:[%s161 + $0x438] sm:$0xff]
      %v449 = vld [vmem:[%s161 + $0x440] sm:$0xff]
      %v450 = vld [vmem:[%s161 + $0x448] sm:$0xff]
      %v451 = vld [vmem:[%s161 + $0x450] sm:$0xff]
      %v452 = vld [vmem:[%s161 + $0x458] sm:$0xff]
      %v453 = vld [vmem:[%s161 + $0x460] sm:$0xff]
      %v454 = vld [vmem:[%s161 + $0x468] sm:$0xff]
      %v455 = vld [vmem:[%s161 + $0x470] sm:$0xff]
      %v456 = vld [vmem:[%s161 + $0x478] sm:$0xff]
      %458 = vset.pattern.permute.xlu0 0
      %459 = vperm.xlu0 %458, %v313
      %v460 = vpop.permute.xlu0 %459
      %463 = vset.pattern.permute.xlu0 0
      %464 = vperm.xlu0 %463, %v314
      %v465 = vpop.permute.xlu0 %464
      %468 = vset.pattern.permute.xlu0 0
      %469 = vperm.xlu0 %468, %v315
      %v470 = vpop.permute.xlu0 %469
      %473 = vset.pattern.permute.xlu0 0
      %474 = vperm.xlu0 %473, %v316
      %v475 = vpop.permute.xlu0 %474
      %478 = vset.pattern.permute.xlu0 0
      %479 = vperm.xlu0 %478, %v317
      %v480 = vpop.permute.xlu0 %479
      %483 = vset.pattern.permute.xlu0 0
      %484 = vperm.xlu0 %483, %v318
      %v485 = vpop.permute.xlu0 %484
      %488 = vset.pattern.permute.xlu0 0
      %489 = vperm.xlu0 %488, %v319
      %v490 = vpop.permute.xlu0 %489
      %493 = vset.pattern.permute.xlu0 0
      %494 = vperm.xlu0 %493, %v320
      %v495 = vpop.permute.xlu0 %494
      %498 = vset.pattern.permute.xlu0 0
      %499 = vperm.xlu0 %498, %v321
      %v500 = vpop.permute.xlu0 %499
      %503 = vset.pattern.permute.xlu0 0
      %504 = vperm.xlu0 %503, %v322
      %v505 = vpop.permute.xlu0 %504
      %508 = vset.pattern.permute.xlu0 0
      %509 = vperm.xlu0 %508, %v323
      %v510 = vpop.permute.xlu0 %509
      %513 = vset.pattern.permute.xlu0 0
      %514 = vperm.xlu0 %513, %v324
      %v515 = vpop.permute.xlu0 %514
      %518 = vset.pattern.permute.xlu0 0
      %519 = vperm.xlu0 %518, %v325
      %v520 = vpop.permute.xlu0 %519
      %523 = vset.pattern.permute.xlu0 0
      %524 = vperm.xlu0 %523, %v326
      %v525 = vpop.permute.xlu0 %524
      %528 = vset.pattern.permute.xlu0 0
      %529 = vperm.xlu0 %528, %v327
      %v530 = vpop.permute.xlu0 %529
      %533 = vset.pattern.permute.xlu0 0
      %534 = vperm.xlu0 %533, %v328
      %v535 = vpop.permute.xlu0 %534
      %538 = vset.pattern.permute.xlu0 0
      %539 = vperm.xlu0 %538, %v329
      %v540 = vpop.permute.xlu0 %539
      %543 = vset.pattern.permute.xlu0 0
      %544 = vperm.xlu0 %543, %v330
      %v545 = vpop.permute.xlu0 %544
      %548 = vset.pattern.permute.xlu0 0
      %549 = vperm.xlu0 %548, %v331
      %v550 = vpop.permute.xlu0 %549
      %553 = vset.pattern.permute.xlu0 0
      %554 = vperm.xlu0 %553, %v332
      %v555 = vpop.permute.xlu0 %554
      %558 = vset.pattern.permute.xlu0 0
      %559 = vperm.xlu0 %558, %v333
      %v560 = vpop.permute.xlu0 %559
      %563 = vset.pattern.permute.xlu0 0
      %564 = vperm.xlu0 %563, %v334
      %v565 = vpop.permute.xlu0 %564
      %568 = vset.pattern.permute.xlu0 0
      %569 = vperm.xlu0 %568, %v335
      %v570 = vpop.permute.xlu0 %569
      %573 = vset.pattern.permute.xlu0 0
      %574 = vperm.xlu0 %573, %v336
      %v575 = vpop.permute.xlu0 %574
      %578 = vset.pattern.permute.xlu0 0
      %579 = vperm.xlu0 %578, %v337
      %v580 = vpop.permute.xlu0 %579
      %583 = vset.pattern.permute.xlu0 0
      %584 = vperm.xlu0 %583, %v338
      %v585 = vpop.permute.xlu0 %584
      %588 = vset.pattern.permute.xlu0 0
      %589 = vperm.xlu0 %588, %v339
      %v590 = vpop.permute.xlu0 %589
      %593 = vset.pattern.permute.xlu0 0
      %594 = vperm.xlu0 %593, %v340
      %v595 = vpop.permute.xlu0 %594
      %598 = vset.pattern.permute.xlu0 0
      %599 = vperm.xlu0 %598, %v341
      %v600 = vpop.permute.xlu0 %599
      %603 = vset.pattern.permute.xlu0 0
      %604 = vperm.xlu0 %603, %v342
      %v605 = vpop.permute.xlu0 %604
      %608 = vset.pattern.permute.xlu0 0
      %609 = vperm.xlu0 %608, %v343
      %v610 = vpop.permute.xlu0 %609
      %613 = vset.pattern.permute.xlu0 0
      %614 = vperm.xlu0 %613, %v344
      %v615 = vpop.permute.xlu0 %614
      %618 = vset.pattern.permute.xlu0 0
      %619 = vperm.xlu0 %618, %v345
      %v620 = vpop.permute.xlu0 %619
      %623 = vset.pattern.permute.xlu0 0
      %624 = vperm.xlu0 %623, %v346
      %v625 = vpop.permute.xlu0 %624
      %628 = vset.pattern.permute.xlu0 0
      %629 = vperm.xlu0 %628, %v347
      %v630 = vpop.permute.xlu0 %629
      %633 = vset.pattern.permute.xlu0 0
      %634 = vperm.xlu0 %633, %v348
      %v635 = vpop.permute.xlu0 %634
      %638 = vset.pattern.permute.xlu0 0
      %639 = vperm.xlu0 %638, %v349
      %v640 = vpop.permute.xlu0 %639
      %643 = vset.pattern.permute.xlu0 0
      %644 = vperm.xlu0 %643, %v350
      %v645 = vpop.permute.xlu0 %644
      %648 = vset.pattern.permute.xlu0 0
      %649 = vperm.xlu0 %648, %v351
      %v650 = vpop.permute.xlu0 %649
      %653 = vset.pattern.permute.xlu0 0
      %654 = vperm.xlu0 %653, %v352
      %v655 = vpop.permute.xlu0 %654
      %658 = vset.pattern.permute.xlu0 0
      %659 = vperm.xlu0 %658, %v353
      %v660 = vpop.permute.xlu0 %659
      %663 = vset.pattern.permute.xlu0 0
      %664 = vperm.xlu0 %663, %v354
      %v665 = vpop.permute.xlu0 %664
      %668 = vset.pattern.permute.xlu0 0
      %669 = vperm.xlu0 %668, %v355
      %v670 = vpop.permute.xlu0 %669
      %673 = vset.pattern.permute.xlu0 0
      %674 = vperm.xlu0 %673, %v356
      %v675 = vpop.permute.xlu0 %674
      %678 = vset.pattern.permute.xlu0 0
      %679 = vperm.xlu0 %678, %v357
      %v680 = vpop.permute.xlu0 %679
      %683 = vset.pattern.permute.xlu0 0
      %684 = vperm.xlu0 %683, %v358
      %v685 = vpop.permute.xlu0 %684
      %688 = vset.pattern.permute.xlu0 0
      %689 = vperm.xlu0 %688, %v359
      %v690 = vpop.permute.xlu0 %689
      %693 = vset.pattern.permute.xlu0 0
      %694 = vperm.xlu0 %693, %v360
      %v695 = vpop.permute.xlu0 %694
      %698 = vset.pattern.permute.xlu0 0
      %699 = vperm.xlu0 %698, %v361
      %v700 = vpop.permute.xlu0 %699
      %703 = vset.pattern.permute.xlu0 0
      %704 = vperm.xlu0 %703, %v362
      %v705 = vpop.permute.xlu0 %704
      %708 = vset.pattern.permute.xlu0 0
      %709 = vperm.xlu0 %708, %v363
      %v710 = vpop.permute.xlu0 %709
      %713 = vset.pattern.permute.xlu0 0
      %714 = vperm.xlu0 %713, %v364
      %v715 = vpop.permute.xlu0 %714
      %718 = vset.pattern.permute.xlu0 0
      %719 = vperm.xlu0 %718, %v365
      %v720 = vpop.permute.xlu0 %719
      %723 = vset.pattern.permute.xlu0 0
      %724 = vperm.xlu0 %723, %v366
      %v725 = vpop.permute.xlu0 %724
      %728 = vset.pattern.permute.xlu0 0
      %729 = vperm.xlu0 %728, %v367
      %v730 = vpop.permute.xlu0 %729
      %733 = vset.pattern.permute.xlu0 0
      %734 = vperm.xlu0 %733, %v368
      %v735 = vpop.permute.xlu0 %734
      %738 = vset.pattern.permute.xlu0 0
      %739 = vperm.xlu0 %738, %v369
      %v740 = vpop.permute.xlu0 %739
      %743 = vset.pattern.permute.xlu0 0
      %744 = vperm.xlu0 %743, %v370
      %v745 = vpop.permute.xlu0 %744
      %748 = vset.pattern.permute.xlu0 0
      %749 = vperm.xlu0 %748, %v371
      %v750 = vpop.permute.xlu0 %749
      %753 = vset.pattern.permute.xlu0 0
      %754 = vperm.xlu0 %753, %v372
      %v755 = vpop.permute.xlu0 %754
      %758 = vset.pattern.permute.xlu0 0
      %759 = vperm.xlu0 %758, %v373
      %v760 = vpop.permute.xlu0 %759
      %763 = vset.pattern.permute.xlu0 0
      %764 = vperm.xlu0 %763, %v374
      %v765 = vpop.permute.xlu0 %764
      %768 = vset.pattern.permute.xlu0 0
      %769 = vperm.xlu0 %768, %v375
      %v770 = vpop.permute.xlu0 %769
      %773 = vset.pattern.permute.xlu0 0
      %774 = vperm.xlu0 %773, %v376
      %v775 = vpop.permute.xlu0 %774
      %778 = vset.pattern.permute.xlu0 0
      %779 = vperm.xlu0 %778, %v377
      %v780 = vpop.permute.xlu0 %779
      %783 = vset.pattern.permute.xlu0 0
      %784 = vperm.xlu0 %783, %v378
      %v785 = vpop.permute.xlu0 %784
      %788 = vset.pattern.permute.xlu0 0
      %789 = vperm.xlu0 %788, %v379
      %v790 = vpop.permute.xlu0 %789
      %793 = vset.pattern.permute.xlu0 0
      %794 = vperm.xlu0 %793, %v380
      %v795 = vpop.permute.xlu0 %794
      %798 = vset.pattern.permute.xlu0 0
      %799 = vperm.xlu0 %798, %v381
      %v800 = vpop.permute.xlu0 %799
      %803 = vset.pattern.permute.xlu0 0
      %804 = vperm.xlu0 %803, %v382
      %v805 = vpop.permute.xlu0 %804
      %808 = vset.pattern.permute.xlu0 0
      %809 = vperm.xlu0 %808, %v383
      %v810 = vpop.permute.xlu0 %809
      %813 = vset.pattern.permute.xlu0 0
      %814 = vperm.xlu0 %813, %v384
      %v815 = vpop.permute.xlu0 %814
      %818 = vset.pattern.permute.xlu0 0
      %819 = vperm.xlu0 %818, %v385
      %v820 = vpop.permute.xlu0 %819
      %823 = vset.pattern.permute.xlu0 0
      %824 = vperm.xlu0 %823, %v386
      %v825 = vpop.permute.xlu0 %824
      %828 = vset.pattern.permute.xlu0 0
      %829 = vperm.xlu0 %828, %v387
      %v830 = vpop.permute.xlu0 %829
      %833 = vset.pattern.permute.xlu0 0
      %834 = vperm.xlu0 %833, %v388
      %v835 = vpop.permute.xlu0 %834
      %838 = vset.pattern.permute.xlu0 0
      %839 = vperm.xlu0 %838, %v389
      %v840 = vpop.permute.xlu0 %839
      %843 = vset.pattern.permute.xlu0 0
      %844 = vperm.xlu0 %843, %v390
      %v845 = vpop.permute.xlu0 %844
      %848 = vset.pattern.permute.xlu0 0
      %849 = vperm.xlu0 %848, %v391
      %v850 = vpop.permute.xlu0 %849
      %853 = vset.pattern.permute.xlu0 0
      %854 = vperm.xlu0 %853, %v392
      %v855 = vpop.permute.xlu0 %854
      %858 = vset.pattern.permute.xlu0 0
      %859 = vperm.xlu0 %858, %v393
      %v860 = vpop.permute.xlu0 %859
      %863 = vset.pattern.permute.xlu0 0
      %864 = vperm.xlu0 %863, %v394
      %v865 = vpop.permute.xlu0 %864
      %868 = vset.pattern.permute.xlu0 0
      %869 = vperm.xlu0 %868, %v395
      %v870 = vpop.permute.xlu0 %869
      %873 = vset.pattern.permute.xlu0 0
      %874 = vperm.xlu0 %873, %v396
      %v875 = vpop.permute.xlu0 %874
      %878 = vset.pattern.permute.xlu0 0
      %879 = vperm.xlu0 %878, %v397
      %v880 = vpop.permute.xlu0 %879
      %883 = vset.pattern.permute.xlu0 0
      %884 = vperm.xlu0 %883, %v398
      %v885 = vpop.permute.xlu0 %884
      %888 = vset.pattern.permute.xlu0 0
      %889 = vperm.xlu0 %888, %v399
      %v890 = vpop.permute.xlu0 %889
      %893 = vset.pattern.permute.xlu0 0
      %894 = vperm.xlu0 %893, %v400
      %v895 = vpop.permute.xlu0 %894
      %898 = vset.pattern.permute.xlu0 0
      %899 = vperm.xlu0 %898, %v401
      %v900 = vpop.permute.xlu0 %899
      %903 = vset.pattern.permute.xlu0 0
      %904 = vperm.xlu0 %903, %v402
      %v905 = vpop.permute.xlu0 %904
      %908 = vset.pattern.permute.xlu0 0
      %909 = vperm.xlu0 %908, %v403
      %v910 = vpop.permute.xlu0 %909
      %913 = vset.pattern.permute.xlu0 0
      %914 = vperm.xlu0 %913, %v404
      %v915 = vpop.permute.xlu0 %914
      %918 = vset.pattern.permute.xlu0 0
      %919 = vperm.xlu0 %918, %v405
      %v920 = vpop.permute.xlu0 %919
      %923 = vset.pattern.permute.xlu0 0
      %924 = vperm.xlu0 %923, %v406
      %v925 = vpop.permute.xlu0 %924
      %928 = vset.pattern.permute.xlu0 0
      %929 = vperm.xlu0 %928, %v407
      %v930 = vpop.permute.xlu0 %929
      %933 = vset.pattern.permute.xlu0 0
      %934 = vperm.xlu0 %933, %v408
      %v935 = vpop.permute.xlu0 %934
      %938 = vset.pattern.permute.xlu0 0
      %939 = vperm.xlu0 %938, %v409
      %v940 = vpop.permute.xlu0 %939
      %943 = vset.pattern.permute.xlu0 0
      %944 = vperm.xlu0 %943, %v410
      %v945 = vpop.permute.xlu0 %944
      %948 = vset.pattern.permute.xlu0 0
      %949 = vperm.xlu0 %948, %v411
      %v950 = vpop.permute.xlu0 %949
      %953 = vset.pattern.permute.xlu0 0
      %954 = vperm.xlu0 %953, %v412
      %v955 = vpop.permute.xlu0 %954
      %958 = vset.pattern.permute.xlu0 0
      %959 = vperm.xlu0 %958, %v413
      %v960 = vpop.permute.xlu0 %959
      %963 = vset.pattern.permute.xlu0 0
      %964 = vperm.xlu0 %963, %v414
      %v965 = vpop.permute.xlu0 %964
      %968 = vset.pattern.permute.xlu0 0
      %969 = vperm.xlu0 %968, %v415
      %v970 = vpop.permute.xlu0 %969
      %973 = vset.pattern.permute.xlu0 0
      %974 = vperm.xlu0 %973, %v416
      %v975 = vpop.permute.xlu0 %974
      %978 = vset.pattern.permute.xlu0 0
      %979 = vperm.xlu0 %978, %v417
      %v980 = vpop.permute.xlu0 %979
      %983 = vset.pattern.permute.xlu0 0
      %984 = vperm.xlu0 %983, %v418
      %v985 = vpop.permute.xlu0 %984
      %988 = vset.pattern.permute.xlu0 0
      %989 = vperm.xlu0 %988, %v419
      %v990 = vpop.permute.xlu0 %989
      %993 = vset.pattern.permute.xlu0 0
      %994 = vperm.xlu0 %993, %v420
      %v995 = vpop.permute.xlu0 %994
      %998 = vset.pattern.permute.xlu0 0
      %999 = vperm.xlu0 %998, %v421
      %v1000 = vpop.permute.xlu0 %999
      %1003 = vset.pattern.permute.xlu0 0
      %1004 = vperm.xlu0 %1003, %v422
      %v1005 = vpop.permute.xlu0 %1004
      %1008 = vset.pattern.permute.xlu0 0
      %1009 = vperm.xlu0 %1008, %v423
      %v1010 = vpop.permute.xlu0 %1009
      %1013 = vset.pattern.permute.xlu0 0
      %1014 = vperm.xlu0 %1013, %v424
      %v1015 = vpop.permute.xlu0 %1014
      %1018 = vset.pattern.permute.xlu0 0
      %1019 = vperm.xlu0 %1018, %v425
      %v1020 = vpop.permute.xlu0 %1019
      %1023 = vset.pattern.permute.xlu0 0
      %1024 = vperm.xlu0 %1023, %v426
      %v1025 = vpop.permute.xlu0 %1024
      %1028 = vset.pattern.permute.xlu0 0
      %1029 = vperm.xlu0 %1028, %v427
      %v1030 = vpop.permute.xlu0 %1029
      %1033 = vset.pattern.permute.xlu0 0
      %1034 = vperm.xlu0 %1033, %v428
      %v1035 = vpop.permute.xlu0 %1034
      %1038 = vset.pattern.permute.xlu0 0
      %1039 = vperm.xlu0 %1038, %v429
      %v1040 = vpop.permute.xlu0 %1039
      %1043 = vset.pattern.permute.xlu0 0
      %1044 = vperm.xlu0 %1043, %v430
      %v1045 = vpop.permute.xlu0 %1044
      %1048 = vset.pattern.permute.xlu0 0
      %1049 = vperm.xlu0 %1048, %v431
      %v1050 = vpop.permute.xlu0 %1049
      %1053 = vset.pattern.permute.xlu0 0
      %1054 = vperm.xlu0 %1053, %v432
      %v1055 = vpop.permute.xlu0 %1054
      %1058 = vset.pattern.permute.xlu0 0
      %1059 = vperm.xlu0 %1058, %v433
      %v1060 = vpop.permute.xlu0 %1059
      %1063 = vset.pattern.permute.xlu0 0
      %1064 = vperm.xlu0 %1063, %v434
      %v1065 = vpop.permute.xlu0 %1064
      %1068 = vset.pattern.permute.xlu0 0
      %1069 = vperm.xlu0 %1068, %v435
      %v1070 = vpop.permute.xlu0 %1069
      %1073 = vset.pattern.permute.xlu0 0
      %1074 = vperm.xlu0 %1073, %v436
      %v1075 = vpop.permute.xlu0 %1074
      %1078 = vset.pattern.permute.xlu0 0
      %1079 = vperm.xlu0 %1078, %v437
      %v1080 = vpop.permute.xlu0 %1079
      %1083 = vset.pattern.permute.xlu0 0
      %1084 = vperm.xlu0 %1083, %v438
      %v1085 = vpop.permute.xlu0 %1084
      %1088 = vset.pattern.permute.xlu0 0
      %1089 = vperm.xlu0 %1088, %v439
      %v1090 = vpop.permute.xlu0 %1089
      %1093 = vset.pattern.permute.xlu0 0
      %1094 = vperm.xlu0 %1093, %v440
      %v1095 = vpop.permute.xlu0 %1094
      %1098 = vset.pattern.permute.xlu0 0
      %1099 = vperm.xlu0 %1098, %v441
      %v1100 = vpop.permute.xlu0 %1099
      %1103 = vset.pattern.permute.xlu0 0
      %1104 = vperm.xlu0 %1103, %v442
      %v1105 = vpop.permute.xlu0 %1104
      %1108 = vset.pattern.permute.xlu0 0
      %1109 = vperm.xlu0 %1108, %v443
      %v1110 = vpop.permute.xlu0 %1109
      %1113 = vset.pattern.permute.xlu0 0
      %1114 = vperm.xlu0 %1113, %v444
      %v1115 = vpop.permute.xlu0 %1114
      %1118 = vset.pattern.permute.xlu0 0
      %1119 = vperm.xlu0 %1118, %v445
      %v1120 = vpop.permute.xlu0 %1119
      %1123 = vset.pattern.permute.xlu0 0
      %1124 = vperm.xlu0 %1123, %v446
      %v1125 = vpop.permute.xlu0 %1124
      %1128 = vset.pattern.permute.xlu0 0
      %1129 = vperm.xlu0 %1128, %v447
      %v1130 = vpop.permute.xlu0 %1129
      %1133 = vset.pattern.permute.xlu0 0
      %1134 = vperm.xlu0 %1133, %v448
      %v1135 = vpop.permute.xlu0 %1134
      %1138 = vset.pattern.permute.xlu0 0
      %1139 = vperm.xlu0 %1138, %v449
      %v1140 = vpop.permute.xlu0 %1139
      %1143 = vset.pattern.permute.xlu0 0
      %1144 = vperm.xlu0 %1143, %v450
      %v1145 = vpop.permute.xlu0 %1144
      %1148 = vset.pattern.permute.xlu0 0
      %1149 = vperm.xlu0 %1148, %v451
      %v1150 = vpop.permute.xlu0 %1149
      %1153 = vset.pattern.permute.xlu0 0
      %1154 = vperm.xlu0 %1153, %v452
      %v1155 = vpop.permute.xlu0 %1154
      %1158 = vset.pattern.permute.xlu0 0
      %1159 = vperm.xlu0 %1158, %v453
      %v1160 = vpop.permute.xlu0 %1159
      %1163 = vset.pattern.permute.xlu0 0
      %1164 = vperm.xlu0 %1163, %v454
      %v1165 = vpop.permute.xlu0 %1164
      %1168 = vset.pattern.permute.xlu0 0
      %1169 = vperm.xlu0 %1168, %v455
      %v1170 = vpop.permute.xlu0 %1169
      %1173 = vset.pattern.permute.xlu0 0
      %1174 = vperm.xlu0 %1173, %v456
      %v1175 = vpop.permute.xlu0 %1174
      %v1177 = vmul.f32 %v169, %v460
      %v1178 = vmul.f32 %v170, %v465
      %v1179 = vmul.f32 %v171, %v470
      %v1180 = vmul.f32 %v172, %v475
      %v1181 = vmul.f32 %v173, %v480
      %v1182 = vmul.f32 %v174, %v485
      %v1183 = vmul.f32 %v175, %v490
      %v1184 = vmul.f32 %v176, %v495
      %v1185 = vmul.f32 %v177, %v500
      %v1186 = vmul.f32 %v178, %v505
      %v1187 = vmul.f32 %v179, %v510
      %v1188 = vmul.f32 %v180, %v515
      %v1189 = vmul.f32 %v181, %v520
      %v1190 = vmul.f32 %v182, %v525
      %v1191 = vmul.f32 %v183, %v530
      %v1192 = vmul.f32 %v184, %v535
      %v1193 = vmul.f32 %v185, %v540
      %v1194 = vmul.f32 %v186, %v545
      %v1195 = vmul.f32 %v187, %v550
      %v1196 = vmul.f32 %v188, %v555
      %v1197 = vmul.f32 %v189, %v560
      %v1198 = vmul.f32 %v190, %v565
      %v1199 = vmul.f32 %v191, %v570
      %v1200 = vmul.f32 %v192, %v575
      %v1201 = vmul.f32 %v193, %v580
      %v1202 = vmul.f32 %v194, %v585
      %v1203 = vmul.f32 %v195, %v590
      %v1204 = vmul.f32 %v196, %v595
      %v1205 = vmul.f32 %v197, %v600
      %v1206 = vmul.f32 %v198, %v605
      %v1207 = vmul.f32 %v199, %v610
      %v1208 = vmul.f32 %v200, %v615
      %v1209 = vmul.f32 %v201, %v620
      %v1210 = vmul.f32 %v202, %v625
      %v1211 = vmul.f32 %v203, %v630
      %v1212 = vmul.f32 %v204, %v635
      %v1213 = vmul.f32 %v205, %v640
      %v1214 = vmul.f32 %v206, %v645
      %v1215 = vmul.f32 %v207, %v650
      %v1216 = vmul.f32 %v208, %v655
      %v1217 = vmul.f32 %v209, %v660
      %v1218 = vmul.f32 %v210, %v665
      %v1219 = vmul.f32 %v211, %v670
      %v1220 = vmul.f32 %v212, %v675
      %v1221 = vmul.f32 %v213, %v680
      %v1222 = vmul.f32 %v214, %v685
      %v1223 = vmul.f32 %v215, %v690
      %v1224 = vmul.f32 %v216, %v695
      %v1225 = vmul.f32 %v217, %v700
      %v1226 = vmul.f32 %v218, %v705
      %v1227 = vmul.f32 %v219, %v710
      %v1228 = vmul.f32 %v220, %v715
      %v1229 = vmul.f32 %v221, %v720
      %v1230 = vmul.f32 %v222, %v725
      %v1231 = vmul.f32 %v223, %v730
      %v1232 = vmul.f32 %v224, %v735
      %v1233 = vmul.f32 %v225, %v740
      %v1234 = vmul.f32 %v226, %v745
      %v1235 = vmul.f32 %v227, %v750
      %v1236 = vmul.f32 %v228, %v755
      %v1237 = vmul.f32 %v229, %v760
      %v1238 = vmul.f32 %v230, %v765
      %v1239 = vmul.f32 %v231, %v770
      %v1240 = vmul.f32 %v232, %v775
      %v1241 = vmul.f32 %v233, %v780
      %v1242 = vmul.f32 %v234, %v785
      %v1243 = vmul.f32 %v235, %v790
      %v1244 = vmul.f32 %v236, %v795
      %v1245 = vmul.f32 %v237, %v800
      %v1246 = vmul.f32 %v238, %v805
      %v1247 = vmul.f32 %v239, %v810
      %v1248 = vmul.f32 %v240, %v815
      %v1249 = vmul.f32 %v241, %v820
      %v1250 = vmul.f32 %v242, %v825
      %v1251 = vmul.f32 %v243, %v830
      %v1252 = vmul.f32 %v244, %v835
      %v1253 = vmul.f32 %v245, %v840
      %v1254 = vmul.f32 %v246, %v845
      %v1255 = vmul.f32 %v247, %v850
      %v1256 = vmul.f32 %v248, %v855
      %v1257 = vmul.f32 %v249, %v860
      %v1258 = vmul.f32 %v250, %v865
      %v1259 = vmul.f32 %v251, %v870
      %v1260 = vmul.f32 %v252, %v875
      %v1261 = vmul.f32 %v253, %v880
      %v1262 = vmul.f32 %v254, %v885
      %v1263 = vmul.f32 %v255, %v890
      %v1264 = vmul.f32 %v256, %v895
      %v1265 = vmul.f32 %v257, %v900
      %v1266 = vmul.f32 %v258, %v905
      %v1267 = vmul.f32 %v259, %v910
      %v1268 = vmul.f32 %v260, %v915
      %v1269 = vmul.f32 %v261, %v920
      %v1270 = vmul.f32 %v262, %v925
      %v1271 = vmul.f32 %v263, %v930
      %v1272 = vmul.f32 %v264, %v935
      %v1273 = vmul.f32 %v265, %v940
      %v1274 = vmul.f32 %v266, %v945
      %v1275 = vmul.f32 %v267, %v950
      %v1276 = vmul.f32 %v268, %v955
      %v1277 = vmul.f32 %v269, %v960
      %v1278 = vmul.f32 %v270, %v965
      %v1279 = vmul.f32 %v271, %v970
      %v1280 = vmul.f32 %v272, %v975
      %v1281 = vmul.f32 %v273, %v980
      %v1282 = vmul.f32 %v274, %v985
      %v1283 = vmul.f32 %v275, %v990
      %v1284 = vmul.f32 %v276, %v995
      %v1285 = vmul.f32 %v277, %v1000
      %v1286 = vmul.f32 %v278, %v1005
      %v1287 = vmul.f32 %v279, %v1010
      %v1288 = vmul.f32 %v280, %v1015
      %v1289 = vmul.f32 %v281, %v1020
      %v1290 = vmul.f32 %v282, %v1025
      %v1291 = vmul.f32 %v283, %v1030
      %v1292 = vmul.f32 %v284, %v1035
      %v1293 = vmul.f32 %v285, %v1040
      %v1294 = vmul.f32 %v286, %v1045
      %v1295 = vmul.f32 %v287, %v1050
      %v1296 = vmul.f32 %v288, %v1055
      %v1297 = vmul.f32 %v289, %v1060
      %v1298 = vmul.f32 %v290, %v1065
      %v1299 = vmul.f32 %v291, %v1070
      %v1300 = vmul.f32 %v292, %v1075
      %v1301 = vmul.f32 %v293, %v1080
      %v1302 = vmul.f32 %v294, %v1085
      %v1303 = vmul.f32 %v295, %v1090
      %v1304 = vmul.f32 %v296, %v1095
      %v1305 = vmul.f32 %v297, %v1100
      %v1306 = vmul.f32 %v298, %v1105
      %v1307 = vmul.f32 %v299, %v1110
      %v1308 = vmul.f32 %v300, %v1115
      %v1309 = vmul.f32 %v301, %v1120
      %v1310 = vmul.f32 %v302, %v1125
      %v1311 = vmul.f32 %v303, %v1130
      %v1312 = vmul.f32 %v304, %v1135
      %v1313 = vmul.f32 %v305, %v1140
      %v1314 = vmul.f32 %v306, %v1145
      %v1315 = vmul.f32 %v307, %v1150
      %v1316 = vmul.f32 %v308, %v1155
      %v1317 = vmul.f32 %v309, %v1160
      %v1318 = vmul.f32 %v310, %v1165
      %v1319 = vmul.f32 %v311, %v1170
      %v1320 = vmul.f32 %v312, %v1175
      %vm1321 = vcmask 400384
      %1322 = vst.msk [vmem:[%s167] sm:$0xff] %vm1321, %v1177
      %1323 = vst.msk [vmem:[%s167 + $0x8] sm:$0xff] %vm1321, %v1178
      %1324 = vst.msk [vmem:[%s167 + $0x10] sm:$0xff] %vm1321, %v1179
      %1325 = vst.msk [vmem:[%s167 + $0x18] sm:$0xff] %vm1321, %v1180
      %1326 = vst.msk [vmem:[%s167 + $0x20] sm:$0xff] %vm1321, %v1181
      %1327 = vst.msk [vmem:[%s167 + $0x28] sm:$0xff] %vm1321, %v1182
      %1328 = vst.msk [vmem:[%s167 + $0x30] sm:$0xff] %vm1321, %v1183
      %1329 = vst.msk [vmem:[%s167 + $0x38] sm:$0xff] %vm1321, %v1184
      %1330 = vst.msk [vmem:[%s167 + $0x40] sm:$0xff] %vm1321, %v1185
      %1331 = vst.msk [vmem:[%s167 + $0x48] sm:$0xff] %vm1321, %v1186
      %1332 = vst.msk [vmem:[%s167 + $0x50] sm:$0xff] %vm1321, %v1187
      %1333 = vst.msk [vmem:[%s167 + $0x58] sm:$0xff] %vm1321, %v1188
      %1334 = vst.msk [vmem:[%s167 + $0x60] sm:$0xff] %vm1321, %v1189
      %1335 = vst.msk [vmem:[%s167 + $0x68] sm:$0xff] %vm1321, %v1190
      %1336 = vst.msk [vmem:[%s167 + $0x70] sm:$0xff] %vm1321, %v1191
      %1337 = vst.msk [vmem:[%s167 + $0x78] sm:$0xff] %vm1321, %v1192
      %1338 = vst.msk [vmem:[%s167 + $0x80] sm:$0xff] %vm1321, %v1193
      %1339 = vst.msk [vmem:[%s167 + $0x88] sm:$0xff] %vm1321, %v1194
      %1340 = vst.msk [vmem:[%s167 + $0x90] sm:$0xff] %vm1321, %v1195
      %1341 = vst.msk [vmem:[%s167 + $0x98] sm:$0xff] %vm1321, %v1196
      %1342 = vst.msk [vmem:[%s167 + $0xa0] sm:$0xff] %vm1321, %v1197
      %1343 = vst.msk [vmem:[%s167 + $0xa8] sm:$0xff] %vm1321, %v1198
      %1344 = vst.msk [vmem:[%s167 + $0xb0] sm:$0xff] %vm1321, %v1199
      %1345 = vst.msk [vmem:[%s167 + $0xb8] sm:$0xff] %vm1321, %v1200
      %1346 = vst.msk [vmem:[%s167 + $0xc0] sm:$0xff] %vm1321, %v1201
      %1347 = vst.msk [vmem:[%s167 + $0xc8] sm:$0xff] %vm1321, %v1202
      %1348 = vst.msk [vmem:[%s167 + $0xd0] sm:$0xff] %vm1321, %v1203
      %1349 = vst.msk [vmem:[%s167 + $0xd8] sm:$0xff] %vm1321, %v1204
      %1350 = vst.msk [vmem:[%s167 + $0xe0] sm:$0xff] %vm1321, %v1205
      %1351 = vst.msk [vmem:[%s167 + $0xe8] sm:$0xff] %vm1321, %v1206
      %1352 = vst.msk [vmem:[%s167 + $0xf0] sm:$0xff] %vm1321, %v1207
      %1353 = vst.msk [vmem:[%s167 + $0xf8] sm:$0xff] %vm1321, %v1208
      %1354 = vst.msk [vmem:[%s167 + $0x100] sm:$0xff] %vm1321, %v1209
      %1355 = vst.msk [vmem:[%s167 + $0x108] sm:$0xff] %vm1321, %v1210
      %1356 = vst.msk [vmem:[%s167 + $0x110] sm:$0xff] %vm1321, %v1211
      %1357 = vst.msk [vmem:[%s167 + $0x118] sm:$0xff] %vm1321, %v1212
      %1358 = vst.msk [vmem:[%s167 + $0x120] sm:$0xff] %vm1321, %v1213
      %1359 = vst.msk [vmem:[%s167 + $0x128] sm:$0xff] %vm1321, %v1214
      %1360 = vst.msk [vmem:[%s167 + $0x130] sm:$0xff] %vm1321, %v1215
      %1361 = vst.msk [vmem:[%s167 + $0x138] sm:$0xff] %vm1321, %v1216
      %1362 = vst.msk [vmem:[%s167 + $0x140] sm:$0xff] %vm1321, %v1217
      %1363 = vst.msk [vmem:[%s167 + $0x148] sm:$0xff] %vm1321, %v1218
      %1364 = vst.msk [vmem:[%s167 + $0x150] sm:$0xff] %vm1321, %v1219
      %1365 = vst.msk [vmem:[%s167 + $0x158] sm:$0xff] %vm1321, %v1220
      %1366 = vst.msk [vmem:[%s167 + $0x160] sm:$0xff] %vm1321, %v1221
      %1367 = vst.msk [vmem:[%s167 + $0x168] sm:$0xff] %vm1321, %v1222
      %1368 = vst.msk [vmem:[%s167 + $0x170] sm:$0xff] %vm1321, %v1223
      %1369 = vst.msk [vmem:[%s167 + $0x178] sm:$0xff] %vm1321, %v1224
      %1370 = vst.msk [vmem:[%s167 + $0x180] sm:$0xff] %vm1321, %v1225
      %1371 = vst.msk [vmem:[%s167 + $0x188] sm:$0xff] %vm1321, %v1226
      %1372 = vst.msk [vmem:[%s167 + $0x190] sm:$0xff] %vm1321, %v1227
      %1373 = vst.msk [vmem:[%s167 + $0x198] sm:$0xff] %vm1321, %v1228
      %1374 = vst.msk [vmem:[%s167 + $0x1a0] sm:$0xff] %vm1321, %v1229
      %1375 = vst.msk [vmem:[%s167 + $0x1a8] sm:$0xff] %vm1321, %v1230
      %1376 = vst.msk [vmem:[%s167 + $0x1b0] sm:$0xff] %vm1321, %v1231
      %1377 = vst.msk [vmem:[%s167 + $0x1b8] sm:$0xff] %vm1321, %v1232
      %1378 = vst.msk [vmem:[%s167 + $0x1c0] sm:$0xff] %vm1321, %v1233
      %1379 = vst.msk [vmem:[%s167 + $0x1c8] sm:$0xff] %vm1321, %v1234
      %1380 = vst.msk [vmem:[%s167 + $0x1d0] sm:$0xff] %vm1321, %v1235
      %1381 = vst.msk [vmem:[%s167 + $0x1d8] sm:$0xff] %vm1321, %v1236
      %1382 = vst.msk [vmem:[%s167 + $0x1e0] sm:$0xff] %vm1321, %v1237
      %1383 = vst.msk [vmem:[%s167 + $0x1e8] sm:$0xff] %vm1321, %v1238
      %1384 = vst.msk [vmem:[%s167 + $0x1f0] sm:$0xff] %vm1321, %v1239
      %1385 = vst.msk [vmem:[%s167 + $0x1f8] sm:$0xff] %vm1321, %v1240
      %1386 = vst.msk [vmem:[%s167 + $0x200] sm:$0xff] %vm1321, %v1241
      %1387 = vst.msk [vmem:[%s167 + $0x208] sm:$0xff] %vm1321, %v1242
      %1388 = vst.msk [vmem:[%s167 + $0x210] sm:$0xff] %vm1321, %v1243
      %1389 = vst.msk [vmem:[%s167 + $0x218] sm:$0xff] %vm1321, %v1244
      %1390 = vst.msk [vmem:[%s167 + $0x220] sm:$0xff] %vm1321, %v1245
      %1391 = vst.msk [vmem:[%s167 + $0x228] sm:$0xff] %vm1321, %v1246
      %1392 = vst.msk [vmem:[%s167 + $0x230] sm:$0xff] %vm1321, %v1247
      %1393 = vst.msk [vmem:[%s167 + $0x238] sm:$0xff] %vm1321, %v1248
      %1394 = vst.msk [vmem:[%s167 + $0x240] sm:$0xff] %vm1321, %v1249
      %1395 = vst.msk [vmem:[%s167 + $0x248] sm:$0xff] %vm1321, %v1250
      %1396 = vst.msk [vmem:[%s167 + $0x250] sm:$0xff] %vm1321, %v1251
      %1397 = vst.msk [vmem:[%s167 + $0x258] sm:$0xff] %vm1321, %v1252
      %1398 = vst.msk [vmem:[%s167 + $0x260] sm:$0xff] %vm1321, %v1253
      %1399 = vst.msk [vmem:[%s167 + $0x268] sm:$0xff] %vm1321, %v1254
      %1400 = vst.msk [vmem:[%s167 + $0x270] sm:$0xff] %vm1321, %v1255
      %1401 = vst.msk [vmem:[%s167 + $0x278] sm:$0xff] %vm1321, %v1256
      %1402 = vst.msk [vmem:[%s167 + $0x280] sm:$0xff] %vm1321, %v1257
      %1403 = vst.msk [vmem:[%s167 + $0x288] sm:$0xff] %vm1321, %v1258
      %1404 = vst.msk [vmem:[%s167 + $0x290] sm:$0xff] %vm1321, %v1259
      %1405 = vst.msk [vmem:[%s167 + $0x298] sm:$0xff] %vm1321, %v1260
      %1406 = vst.msk [vmem:[%s167 + $0x2a0] sm:$0xff] %vm1321, %v1261
      %1407 = vst.msk [vmem:[%s167 + $0x2a8] sm:$0xff] %vm1321, %v1262
      %1408 = vst.msk [vmem:[%s167 + $0x2b0] sm:$0xff] %vm1321, %v1263
      %1409 = vst.msk [vmem:[%s167 + $0x2b8] sm:$0xff] %vm1321, %v1264
      %1410 = vst.msk [vmem:[%s167 + $0x2c0] sm:$0xff] %vm1321, %v1265
      %1411 = vst.msk [vmem:[%s167 + $0x2c8] sm:$0xff] %vm1321, %v1266
      %1412 = vst.msk [vmem:[%s167 + $0x2d0] sm:$0xff] %vm1321, %v1267
      %1413 = vst.msk [vmem:[%s167 + $0x2d8] sm:$0xff] %vm1321, %v1268
      %1414 = vst.msk [vmem:[%s167 + $0x2e0] sm:$0xff] %vm1321, %v1269
      %1415 = vst.msk [vmem:[%s167 + $0x2e8] sm:$0xff] %vm1321, %v1270
      %1416 = vst.msk [vmem:[%s167 + $0x2f0] sm:$0xff] %vm1321, %v1271
      %1417 = vst.msk [vmem:[%s167 + $0x2f8] sm:$0xff] %vm1321, %v1272
      %1418 = vst.msk [vmem:[%s167 + $0x300] sm:$0xff] %vm1321, %v1273
      %1419 = vst.msk [vmem:[%s167 + $0x308] sm:$0xff] %vm1321, %v1274
      %1420 = vst.msk [vmem:[%s167 + $0x310] sm:$0xff] %vm1321, %v1275
      %1421 = vst.msk [vmem:[%s167 + $0x318] sm:$0xff] %vm1321, %v1276
      %1422 = vst.msk [vmem:[%s167 + $0x320] sm:$0xff] %vm1321, %v1277
      %1423 = vst.msk [vmem:[%s167 + $0x328] sm:$0xff] %vm1321, %v1278
      %1424 = vst.msk [vmem:[%s167 + $0x330] sm:$0xff] %vm1321, %v1279
      %1425 = vst.msk [vmem:[%s167 + $0x338] sm:$0xff] %vm1321, %v1280
      %1426 = vst.msk [vmem:[%s167 + $0x340] sm:$0xff] %vm1321, %v1281
      %1427 = vst.msk [vmem:[%s167 + $0x348] sm:$0xff] %vm1321, %v1282
      %1428 = vst.msk [vmem:[%s167 + $0x350] sm:$0xff] %vm1321, %v1283
      %1429 = vst.msk [vmem:[%s167 + $0x358] sm:$0xff] %vm1321, %v1284
      %1430 = vst.msk [vmem:[%s167 + $0x360] sm:$0xff] %vm1321, %v1285
      %1431 = vst.msk [vmem:[%s167 + $0x368] sm:$0xff] %vm1321, %v1286
      %1432 = vst.msk [vmem:[%s167 + $0x370] sm:$0xff] %vm1321, %v1287
      %1433 = vst.msk [vmem:[%s167 + $0x378] sm:$0xff] %vm1321, %v1288
      %1434 = vst.msk [vmem:[%s167 + $0x380] sm:$0xff] %vm1321, %v1289
      %1435 = vst.msk [vmem:[%s167 + $0x388] sm:$0xff] %vm1321, %v1290
      %1436 = vst.msk [vmem:[%s167 + $0x390] sm:$0xff] %vm1321, %v1291
      %1437 = vst.msk [vmem:[%s167 + $0x398] sm:$0xff] %vm1321, %v1292
      %1438 = vst.msk [vmem:[%s167 + $0x3a0] sm:$0xff] %vm1321, %v1293
      %1439 = vst.msk [vmem:[%s167 + $0x3a8] sm:$0xff] %vm1321, %v1294
      %1440 = vst.msk [vmem:[%s167 + $0x3b0] sm:$0xff] %vm1321, %v1295
      %1441 = vst.msk [vmem:[%s167 + $0x3b8] sm:$0xff] %vm1321, %v1296
      %1442 = vst.msk [vmem:[%s167 + $0x3c0] sm:$0xff] %vm1321, %v1297
      %1443 = vst.msk [vmem:[%s167 + $0x3c8] sm:$0xff] %vm1321, %v1298
      %1444 = vst.msk [vmem:[%s167 + $0x3d0] sm:$0xff] %vm1321, %v1299
      %1445 = vst.msk [vmem:[%s167 + $0x3d8] sm:$0xff] %vm1321, %v1300
      %1446 = vst.msk [vmem:[%s167 + $0x3e0] sm:$0xff] %vm1321, %v1301
      %1447 = vst.msk [vmem:[%s167 + $0x3e8] sm:$0xff] %vm1321, %v1302
      %1448 = vst.msk [vmem:[%s167 + $0x3f0] sm:$0xff] %vm1321, %v1303
      %1449 = vst.msk [vmem:[%s167 + $0x3f8] sm:$0xff] %vm1321, %v1304
      %1450 = vst.msk [vmem:[%s167 + $0x400] sm:$0xff] %vm1321, %v1305
      %1451 = vst.msk [vmem:[%s167 + $0x408] sm:$0xff] %vm1321, %v1306
      %1452 = vst.msk [vmem:[%s167 + $0x410] sm:$0xff] %vm1321, %v1307
      %1453 = vst.msk [vmem:[%s167 + $0x418] sm:$0xff] %vm1321, %v1308
      %1454 = vst.msk [vmem:[%s167 + $0x420] sm:$0xff] %vm1321, %v1309
      %1455 = vst.msk [vmem:[%s167 + $0x428] sm:$0xff] %vm1321, %v1310
      %1456 = vst.msk [vmem:[%s167 + $0x430] sm:$0xff] %vm1321, %v1311
      %1457 = vst.msk [vmem:[%s167 + $0x438] sm:$0xff] %vm1321, %v1312
      %1458 = vst.msk [vmem:[%s167 + $0x440] sm:$0xff] %vm1321, %v1313
      %1459 = vst.msk [vmem:[%s167 + $0x448] sm:$0xff] %vm1321, %v1314
      %1460 = vst.msk [vmem:[%s167 + $0x450] sm:$0xff] %vm1321, %v1315
      %1461 = vst.msk [vmem:[%s167 + $0x458] sm:$0xff] %vm1321, %v1316
      %1462 = vst.msk [vmem:[%s167 + $0x460] sm:$0xff] %vm1321, %v1317
      %1463 = vst.msk [vmem:[%s167 + $0x468] sm:$0xff] %vm1321, %v1318
      %1464 = vst.msk [vmem:[%s167 + $0x470] sm:$0xff] %vm1321, %v1319
      %1465 = vst.msk [vmem:[%s167 + $0x478] sm:$0xff] %vm1321, %v1320
      %s1466 = smul.u32 144, %s13
      %p1467 = scmp.lt.s32.totalorder %s1466, 287
      %s1468 = scalar_select %p1467, %s1466, 287
      %s1469 = smul.addr %s1468, 8
      %s1470 = scalar_lea.vmem %s2, %s1469
      // Predicated region
      $region29: #{tpu_custom_call.1} parent=27 // pred_check
        %p1471 = pneg %p83
      $region30: #{tpu_custom_call.1} parent=27 // pred_check_branch
        %1473 = sbr.rel (%p1471) target = $region32
      $region31: #{tpu_custom_call.1} parent=27 // pred_region
        %s1474 = smul.u32 144, %s13
      $region32: #{tpu_custom_call.1} parent=27 // pred_fallthru
        _
    $region28: #{tpu_custom_call.1} parent=5 // pred_fallthru
      _
    %p1475 = scmp.le.s32.totalorder 2, %s8
    // Predicated region
    $region33: #{tpu_custom_call.1} parent=5 // pred_check
      %p1476 = pneg %p1475
    $region34: #{tpu_custom_call.1} parent=5 // pred_check_branch
      %1478 = sbr.rel (%p1476) target = $region36
    $region35: #{tpu_custom_call.1} parent=5 // pred_region
      %s1479 = ssub.s32 %s8, 2
      // Predicated region
      $region37: #{tpu_custom_call.1} parent=35 // pred_check
        %p1480 = pneg %p89
      $region38: #{tpu_custom_call.1} parent=35 // pred_check_branch
        %1482 = sbr.rel (%p1480) target = $region40
      $region39: #{tpu_custom_call.1} parent=35 // pred_region
        %s1483 = smul.u32 144, %s14
        %p1484 = scmp.lt.s32.totalorder %s1483, 287
        %s1485 = scalar_select %p1484, %s1483, 287
        %s1486 = smul.addr %s1485, 8
        %s1487 = scalar_lea.vmem %s2, %s1486
      $region40: #{tpu_custom_call.1} parent=35 // pred_fallthru
        _
    $region36: #{tpu_custom_call.1} parent=5 // pred_fallthru
      _
  $region6: #{tpu_custom_call.1} parent=0 // loop_footer
    %s12 = sadd.s32 1, %s8
  $region7: #{tpu_custom_call.1} parent=0 // loop_footer_branch
    %7 = sbr.rel target = $region3
  $region8: #{tpu_custom_call.1} parent=0 // loop_exit
    _

</llo_original>
